<compile_context>
chip_gen: v6e
topology: v6e:2x2x1
jax: 0.10.0
libtpu: 0.0.40
codegen_flags: <defaults>
</compile_context>

<pallas_src>
import functools

import jax
import jax.numpy as jnp
from jax.experimental import pallas as pl
from jax.experimental.pallas import tpu as pltpu


def _round_up(v, m):
    return (v + m - 1) // m * m


def _sage_layer_kernel(a_ref, x_ref, wl_ref, wr_ref, b_ref, o_ref, *, apply_relu):
    # a_ref : [tm, Np]   bf16 row slab of the row-normalized adjacency
    # x_ref : [Np, Fp]   bf16 full node features (resident; constant index_map)
    # wl_ref: [Fp, Op]   bf16 neighbor-branch weight (pre-transposed)
    # wr_ref: [Fp, Op]   bf16 self-branch weight (pre-transposed)
    # b_ref : [1, Op]    f32 bias
    # o_ref : [tm, Op]   output row slab
    tm = a_ref.shape[0]
    row0 = pl.multiple_of(pl.program_id(0) * tm, tm)

    # Neighbor aggregation: bf16 MXU pass, f32 accumulation.
    agg = jnp.dot(a_ref[...], x_ref[...], preferred_element_type=jnp.float32)

    # Two dots summed into one f32 accumulator (no lane-axis concatenate).
    out = jnp.dot(agg.astype(jnp.bfloat16), wl_ref[...],
                  preferred_element_type=jnp.float32)
    out = out + jnp.dot(x_ref[pl.ds(row0, tm), :], wr_ref[...],
                        preferred_element_type=jnp.float32)
    out = out + b_ref[...]
    if apply_relu:
        out = jnp.maximum(out, 0.0)
    o_ref[...] = out.astype(o_ref.dtype)


def _vmem_limit_bytes(tm, n_p, f_p, o_p):
    """Working-set estimate (double-buffered inputs/outputs), capped for v7x headroom."""
    bf16, f32 = 2, 4
    a_bytes = 2 * tm * n_p * bf16            # double-buffered A row slabs
    x_bytes = 2 * n_p * f_p * bf16           # resident features (conservative 2x)
    w_bytes = 2 * (2 * f_p * o_p * bf16 + o_p * f32)
    o_bytes = 2 * tm * o_p * f32
    slack = 4 * 1024 * 1024                  # compiler scratch / spill headroom
    need = a_bytes + x_bytes + w_bytes + o_bytes + slack
    return min(max(need, 32 * 1024 * 1024), 48 * 1024 * 1024)


def _sage_layer(a_p, x_p, wl, wr, b, *, out_dtype, apply_relu, tm):
    n_p = a_p.shape[0]
    f_p = x_p.shape[1]
    o_p = wl.shape[1]
    nb = n_p // tm

    return pl.pallas_call(
        functools.partial(_sage_layer_kernel, apply_relu=apply_relu),
        out_shape=jax.ShapeDtypeStruct((n_p, o_p), out_dtype),
        grid=(nb,),
        in_specs=[
            pl.BlockSpec((tm, n_p), lambda i: (i, 0)),    # A row slab (streamed/pipelined)
            pl.BlockSpec((n_p, f_p), lambda i: (0, 0)),   # full X (resident)
            pl.BlockSpec((f_p, o_p), lambda i: (0, 0)),   # W_l^T
            pl.BlockSpec((f_p, o_p), lambda i: (0, 0)),   # W_r^T
            pl.BlockSpec((1, o_p), lambda i: (0, 0)),     # bias
        ],
        out_specs=pl.BlockSpec((tm, o_p), lambda i: (i, 0)),
        compiler_params=pltpu.CompilerParams(
            dimension_semantics=("parallel",),            # row blocks independent (2 TCs on v7x)
            vmem_limit_bytes=_vmem_limit_bytes(tm, n_p, f_p, o_p),
        ),
    )(a_p, x_p, wl, wr, b)


def build_mean_adjacency(edge_index, num_nodes):
    """Dense row-normalized adjacency: A_norm[i, j] = 1/deg_in(i) per edge j->i (f32)."""
    src = edge_index[0]
    dst = edge_index[1]
    a = jnp.zeros((num_nodes, num_nodes), jnp.float32)
    a = a.at[dst, src].add(1.0)
    deg = jnp.sum(a, axis=1, keepdims=True)
    return a / jnp.maximum(deg, 1.0)


def init_gnn_params(key, in_channels, hidden_channels, out_channels):
    k = jax.random.split(key, 6)
    scale1 = 1.0 / jnp.sqrt(jnp.float32(in_channels))
    scale2 = 1.0 / jnp.sqrt(jnp.float32(hidden_channels))
    return {
        # stored pre-transposed: [Fin, Fout]
        "w_l1": jax.random.normal(k[0], (in_channels, hidden_channels), jnp.float32) * scale1,
        "w_r1": jax.random.normal(k[1], (in_channels, hidden_channels), jnp.float32) * scale1,
        "b1": jax.random.normal(k[2], (hidden_channels,), jnp.float32) * 0.01,
        "w_l2": jax.random.normal(k[3], (hidden_channels, out_channels), jnp.float32) * scale2,
        "w_r2": jax.random.normal(k[4], (hidden_channels, out_channels), jnp.float32) * scale2,
        "b2": jax.random.normal(k[5], (out_channels,), jnp.float32) * 0.01,
    }


@jax.jit
def gnn_forward(params, x, edge_index):
    n, f_in = x.shape
    hidden = params["w_l1"].shape[1]
    f_out = params["w_l2"].shape[1]

    # Padded sizes: node axis -> multiple of 128 (lane/MXU-K dense A), features -> 128.
    n_p = _round_up(n, 128)
    tm = 256 if n_p % 256 == 0 else 128       # row-tile height (85%+ HBM roofline regime)
    f_in_p = _round_up(f_in, 128)
    h_p = _round_up(hidden, 128)
    f_out_p = _round_up(f_out, 128)

    # --- host-side glue (plain JAX): adjacency build, zero-padding, bf16 casts ---
    a = build_mean_adjacency(edge_index, n)
    a_p = jnp.zeros((n_p, n_p), jnp.float32).at[:n, :n].set(a).astype(jnp.bfloat16)
    x_p = jnp.zeros((n_p, f_in_p), jnp.float32).at[:n, :f_in].set(x).astype(jnp.bfloat16)

    wl1 = jnp.zeros((f_in_p, h_p), jnp.float32).at[:f_in, :hidden].set(params["w_l1"]).astype(jnp.bfloat16)
    wr1 = jnp.zeros((f_in_p, h_p), jnp.float32).at[:f_in, :hidden].set(params["w_r1"]).astype(jnp.bfloat16)
    b1 = jnp.zeros((1, h_p), jnp.float32).at[0, :hidden].set(params["b1"])

    wl2 = jnp.zeros((h_p, f_out_p), jnp.float32).at[:hidden, :f_out].set(params["w_l2"]).astype(jnp.bfloat16)
    wr2 = jnp.zeros((h_p, f_out_p), jnp.float32).at[:hidden, :f_out].set(params["w_r2"]).astype(jnp.bfloat16)
    b2 = jnp.zeros((1, f_out_p), jnp.float32).at[0, :f_out].set(params["b2"])

    # Layer 1: SAGEConv + ReLU (H stays bf16 as the MXU input of layer 2).
    h_p_arr = _sage_layer(a_p, x_p, wl1, wr1, b1,
                          out_dtype=jnp.bfloat16, apply_relu=True, tm=tm)
    # Layer 2: SAGEConv (no activation), f32 lane-dense output.
    out_p = _sage_layer(a_p, h_p_arr, wl2, wr2, b2,
                        out_dtype=jnp.float32, apply_relu=False, tm=tm)

    return out_p[:n, :f_out]


def gnn_reference(params, x, edge_index):
    """Pure-JAX f32 reference for correctness checking."""
    n = x.shape[0]
    a = build_mean_adjacency(edge_index, n)

    def layer(xx, wl, wr, b):
        return (a @ xx) @ wl + xx @ wr + b[None, :]

    h = jnp.maximum(layer(x, params["w_l1"], params["w_r1"], params["b1"]), 0.0)
    return layer(h, params["w_l2"], params["w_r2"], params["b2"])


if __name__ == "__main__":
    key = jax.random.PRNGKey(0)
    k_x, k_e, k_p = jax.random.split(key, 3)

    num_nodes = 16
    in_channels = 32
    hidden_channels = 64
    out_channels = 32
    num_edges = 48

    x = jax.random.normal(k_x, (num_nodes, in_channels), jnp.float32)
    edge_index = jax.random.randint(k_e, (2, num_edges), 0, num_nodes, jnp.int32)

    params = init_gnn_params(k_p, in_channels, hidden_channels, out_channels)

    out = gnn_forward(params, x, edge_index)
    out = jax.block_until_ready(out)

    ref = gnn_reference(params, x, edge_index)
    assert out.shape == (num_nodes, out_channels)
    # bf16 MXU inputs with f32 accumulation -> tolerance loosened vs. the pure-f32 version.
    assert jnp.allclose(out, ref, atol=5e-2, rtol=5e-2), "Pallas output mismatch vs reference"

    print("KERNEL_OK")
</pallas_src>

<mosaic_0001>
module attributes {stable_mosaic.version = 11 : i64} {
  func.func private @main(%arg0: i32) attributes {dimension_semantics = [#tpu.dimension_semantics<core_parallel>], iteration_bounds = array<i64: 2>, tpu.core_type = #tpu.core_type<sc_scalar_subcore>, window_params = []} {
    return
  }
}

module attributes {stable_mosaic.version = 11 : i64} {
  func.func private @main(%arg0: i32) attributes {dimension_semantics = [#tpu.dimension_semantics<core_parallel>], iteration_bounds = array<i64: 2>, tpu.core_type = #tpu.core_type<sc_scalar_subcore>, window_params = []} {
    return
  }
}

module attributes {stable_mosaic.version = 11 : i64} {
  func.func @_sage_layer_kernel(%arg0: i32, %arg1: memref<128x128xbf16, #tpu.memory_space<vmem>>, %arg2: memref<128x128xbf16, #tpu.memory_space<vmem>>, %arg3: memref<128x128xbf16, #tpu.memory_space<vmem>>, %arg4: memref<128x128xbf16, #tpu.memory_space<vmem>>, %arg5: memref<1x128xf32, #tpu.memory_space<vmem>>, %arg6: memref<128x128xbf16, #tpu.memory_space<vmem>>) attributes {dimension_semantics = [#tpu.dimension_semantics<parallel>], iteration_bounds = array<i64: 1>, scalar_prefetch = 0 : i64, scratch_operands = 0 : i64, tpu.core_type = #tpu.core_type<tc>, window_params = [{transform_indices = @transform_0, window_bounds = array<i64: 128, 128>}, {pipeline_mode = #tpu.pipeline_mode<synchronous>, transform_indices = @transform_1, window_bounds = array<i64: 128, 128>}, {pipeline_mode = #tpu.pipeline_mode<synchronous>, transform_indices = @transform_2, window_bounds = array<i64: 128, 128>}, {pipeline_mode = #tpu.pipeline_mode<synchronous>, transform_indices = @transform_3, window_bounds = array<i64: 128, 128>}, {pipeline_mode = #tpu.pipeline_mode<synchronous>, transform_indices = @transform_4, window_bounds = array<i64: 1, 128>}, {transform_indices = @transform_5, window_bounds = array<i64: 128, 128>}]} {
    %c128_i32 = arith.constant 128 : i32
    %0 = arith.muli %arg0, %c128_i32 : i32
    %1 = tpu.assume_multiple %0, 128 : i32
    %c0 = arith.constant 0 : index
    %c0_0 = arith.constant 0 : index
    %2 = vector.load %arg1[%c0, %c0_0] : memref<128x128xbf16, #tpu.memory_space<vmem>>, vector<128x128xbf16>
    %c0_1 = arith.constant 0 : index
    %c0_2 = arith.constant 0 : index
    %3 = vector.load %arg2[%c0_1, %c0_2] : memref<128x128xbf16, #tpu.memory_space<vmem>>, vector<128x128xbf16>
    %cst = arith.constant dense<0.000000e+00> : vector<128x128xf32>
    %4 = tpu.matmul %2, %3, %cst {dimension_numbers = #tpu.dot_dimension_numbers<[1], [0], [0], [1], [0, 0, 1, 1], [], []>} : vector<128x128xbf16>, vector<128x128xbf16>, vector<128x128xf32> -> vector<128x128xf32>
    %5 = arith.truncf %4 : vector<128x128xf32> to vector<128x128xbf16>
    %c0_3 = arith.constant 0 : index
    %c0_4 = arith.constant 0 : index
    %6 = vector.load %arg3[%c0_3, %c0_4] : memref<128x128xbf16, #tpu.memory_space<vmem>>, vector<128x128xbf16>
    %cst_5 = arith.constant dense<0.000000e+00> : vector<128x128xf32>
    %7 = tpu.matmul %5, %6, %cst_5 {dimension_numbers = #tpu.dot_dimension_numbers<[1], [0], [0], [1], [0, 0, 1, 1], [], []>} : vector<128x128xbf16>, vector<128x128xbf16>, vector<128x128xf32> -> vector<128x128xf32>
    %8 = arith.index_cast %1 : i32 to index
    %c0_6 = arith.constant 0 : index
    %9 = vector.load %arg2[%8, %c0_6] : memref<128x128xbf16, #tpu.memory_space<vmem>>, vector<128x128xbf16>
    %c0_7 = arith.constant 0 : index
    %c0_8 = arith.constant 0 : index
    %10 = vector.load %arg4[%c0_7, %c0_8] : memref<128x128xbf16, #tpu.memory_space<vmem>>, vector<128x128xbf16>
    %cst_9 = arith.constant dense<0.000000e+00> : vector<128x128xf32>
    %11 = tpu.matmul %9, %10, %cst_9 {dimension_numbers = #tpu.dot_dimension_numbers<[1], [0], [0], [1], [0, 0, 1, 1], [], []>} : vector<128x128xbf16>, vector<128x128xbf16>, vector<128x128xf32> -> vector<128x128xf32>
    %12 = arith.addf %7, %11 : vector<128x128xf32>
    %c0_10 = arith.constant 0 : index
    %c0_11 = arith.constant 0 : index
    %13 = vector.load %arg5[%c0_10, %c0_11] : memref<1x128xf32, #tpu.memory_space<vmem>>, vector<1x128xf32>
    %14 = vector.broadcast %13 : vector<1x128xf32> to vector<128x128xf32>
    %15 = arith.addf %12, %14 : vector<128x128xf32>
    %cst_12 = arith.constant 0.000000e+00 : f32
    %16 = vector.broadcast %cst_12 : f32 to vector<128x128xf32>
    %17 = arith.maximumf %15, %16 : vector<128x128xf32>
    %18 = arith.truncf %17 : vector<128x128xf32> to vector<128x128xbf16>
    %c0_13 = arith.constant 0 : index
    %c0_14 = arith.constant 0 : index
    %19 = vector.load %arg6[%c0_13, %c0_14] : memref<128x128xbf16, #tpu.memory_space<vmem>>, vector<128x128xbf16>
    tpu.vector_store %arg6[%c0_13, %c0_14], %18 {strides = array<i32>} : memref<128x128xbf16, #tpu.memory_space<vmem>>, vector<128x128xbf16>,
    return
  }
  func.func @transform_0(%arg0: i32) -> (i32, i32) {
    %c0_i32 = arith.constant 0 : i32
    %c0_i32_0 = arith.constant 0 : i32
    return %arg0, %c0_i32 : i32, i32
  }
  func.func @transform_1(%arg0: i32) -> (i32, i32) {
    %c0_i32 = arith.constant 0 : i32
    %c0_i32_0 = arith.constant 0 : i32
    %c0_i32_1 = arith.constant 0 : i32
    return %c0_i32, %c0_i32_0 : i32, i32
  }
  func.func @transform_2(%arg0: i32) -> (i32, i32) {
    %c0_i32 = arith.constant 0 : i32
    %c0_i32_0 = arith.constant 0 : i32
    %c0_i32_1 = arith.constant 0 : i32
    return %c0_i32, %c0_i32_0 : i32, i32
  }
  func.func @transform_3(%arg0: i32) -> (i32, i32) {
    %c0_i32 = arith.constant 0 : i32
    %c0_i32_0 = arith.constant 0 : i32
    %c0_i32_1 = arith.constant 0 : i32
    return %c0_i32, %c0_i32_0 : i32, i32
  }
  func.func @transform_4(%arg0: i32) -> (i32, i32) {
    %c0_i32 = arith.constant 0 : i32
    %c0_i32_0 = arith.constant 0 : i32
    %c0_i32_1 = arith.constant 0 : i32
    return %c0_i32, %c0_i32_0 : i32, i32
  }
  func.func @transform_5(%arg0: i32) -> (i32, i32) {
    %c0_i32 = arith.constant 0 : i32
    %c0_i32_0 = arith.constant 0 : i32
    return %arg0, %c0_i32 : i32, i32
  }
}

module attributes {stable_mosaic.version = 11 : i64} {
  func.func @_sage_layer_kernel(%arg0: i32, %arg1: memref<128x128xbf16, #tpu.memory_space<vmem>>, %arg2: memref<128x128xbf16, #tpu.memory_space<vmem>>, %arg3: memref<128x128xbf16, #tpu.memory_space<vmem>>, %arg4: memref<128x128xbf16, #tpu.memory_space<vmem>>, %arg5: memref<1x128xf32, #tpu.memory_space<vmem>>, %arg6: memref<128x128xf32, #tpu.memory_space<vmem>>) attributes {dimension_semantics = [#tpu.dimension_semantics<parallel>], iteration_bounds = array<i64: 1>, scalar_prefetch = 0 : i64, scratch_operands = 0 : i64, tpu.core_type = #tpu.core_type<tc>, window_params = [{transform_indices = @transform_0, window_bounds = array<i64: 128, 128>}, {pipeline_mode = #tpu.pipeline_mode<synchronous>, transform_indices = @transform_1, window_bounds = array<i64: 128, 128>}, {pipeline_mode = #tpu.pipeline_mode<synchronous>, transform_indices = @transform_2, window_bounds = array<i64: 128, 128>}, {pipeline_mode = #tpu.pipeline_mode<synchronous>, transform_indices = @transform_3, window_bounds = array<i64: 128, 128>}, {pipeline_mode = #tpu.pipeline_mode<synchronous>, transform_indices = @transform_4, window_bounds = array<i64: 1, 128>}, {transform_indices = @transform_5, window_bounds = array<i64: 128, 128>}]} {
    %c128_i32 = arith.constant 128 : i32
    %0 = arith.muli %arg0, %c128_i32 : i32
    %1 = tpu.assume_multiple %0, 128 : i32
    %c0 = arith.constant 0 : index
    %c0_0 = arith.constant 0 : index
    %2 = vector.load %arg1[%c0, %c0_0] : memref<128x128xbf16, #tpu.memory_space<vmem>>, vector<128x128xbf16>
    %c0_1 = arith.constant 0 : index
    %c0_2 = arith.constant 0 : index
    %3 = vector.load %arg2[%c0_1, %c0_2] : memref<128x128xbf16, #tpu.memory_space<vmem>>, vector<128x128xbf16>
    %cst = arith.constant dense<0.000000e+00> : vector<128x128xf32>
    %4 = tpu.matmul %2, %3, %cst {dimension_numbers = #tpu.dot_dimension_numbers<[1], [0], [0], [1], [0, 0, 1, 1], [], []>} : vector<128x128xbf16>, vector<128x128xbf16>, vector<128x128xf32> -> vector<128x128xf32>
    %5 = arith.truncf %4 : vector<128x128xf32> to vector<128x128xbf16>
    %c0_3 = arith.constant 0 : index
    %c0_4 = arith.constant 0 : index
    %6 = vector.load %arg3[%c0_3, %c0_4] : memref<128x128xbf16, #tpu.memory_space<vmem>>, vector<128x128xbf16>
    %cst_5 = arith.constant dense<0.000000e+00> : vector<128x128xf32>
    %7 = tpu.matmul %5, %6, %cst_5 {dimension_numbers = #tpu.dot_dimension_numbers<[1], [0], [0], [1], [0, 0, 1, 1], [], []>} : vector<128x128xbf16>, vector<128x128xbf16>, vector<128x128xf32> -> vector<128x128xf32>
    %8 = arith.index_cast %1 : i32 to index
    %c0_6 = arith.constant 0 : index
    %9 = vector.load %arg2[%8, %c0_6] : memref<128x128xbf16, #tpu.memory_space<vmem>>, vector<128x128xbf16>
    %c0_7 = arith.constant 0 : index
    %c0_8 = arith.constant 0 : index
    %10 = vector.load %arg4[%c0_7, %c0_8] : memref<128x128xbf16, #tpu.memory_space<vmem>>, vector<128x128xbf16>
    %cst_9 = arith.constant dense<0.000000e+00> : vector<128x128xf32>
    %11 = tpu.matmul %9, %10, %cst_9 {dimension_numbers = #tpu.dot_dimension_numbers<[1], [0], [0], [1], [0, 0, 1, 1], [], []>} : vector<128x128xbf16>, vector<128x128xbf16>, vector<128x128xf32> -> vector<128x128xf32>
    %12 = arith.addf %7, %11 : vector<128x128xf32>
    %c0_10 = arith.constant 0 : index
    %c0_11 = arith.constant 0 : index
    %13 = vector.load %arg5[%c0_10, %c0_11] : memref<1x128xf32, #tpu.memory_space<vmem>>, vector<1x128xf32>
    %14 = vector.broadcast %13 : vector<1x128xf32> to vector<128x128xf32>
    %15 = arith.addf %12, %14 : vector<128x128xf32>
    %c0_12 = arith.constant 0 : index
    %c0_13 = arith.constant 0 : index
    %16 = vector.load %arg6[%c0_12, %c0_13] : memref<128x128xf32, #tpu.memory_space<vmem>>, vector<128x128xf32>
    tpu.vector_store %arg6[%c0_12, %c0_13], %15 {strides = array<i32>} : memref<128x128xf32, #tpu.memory_space<vmem>>, vector<128x128xf32>,
    return
  }
  func.func @transform_0(%arg0: i32) -> (i32, i32) {
    %c0_i32 = arith.constant 0 : i32
    %c0_i32_0 = arith.constant 0 : i32
    return %arg0, %c0_i32 : i32, i32
  }
  func.func @transform_1(%arg0: i32) -> (i32, i32) {
    %c0_i32 = arith.constant 0 : i32
    %c0_i32_0 = arith.constant 0 : i32
    %c0_i32_1 = arith.constant 0 : i32
    return %c0_i32, %c0_i32_0 : i32, i32
  }
  func.func @transform_2(%arg0: i32) -> (i32, i32) {
    %c0_i32 = arith.constant 0 : i32
    %c0_i32_0 = arith.constant 0 : i32
    %c0_i32_1 = arith.constant 0 : i32
    return %c0_i32, %c0_i32_0 : i32, i32
  }
  func.func @transform_3(%arg0: i32) -> (i32, i32) {
    %c0_i32 = arith.constant 0 : i32
    %c0_i32_0 = arith.constant 0 : i32
    %c0_i32_1 = arith.constant 0 : i32
    return %c0_i32, %c0_i32_0 : i32, i32
  }
  func.func @transform_4(%arg0: i32) -> (i32, i32) {
    %c0_i32 = arith.constant 0 : i32
    %c0_i32_0 = arith.constant 0 : i32
    %c0_i32_1 = arith.constant 0 : i32
    return %c0_i32, %c0_i32_0 : i32, i32
  }
  func.func @transform_5(%arg0: i32) -> (i32, i32) {
    %c0_i32 = arith.constant 0 : i32
    %c0_i32_0 = arith.constant 0 : i32
    return %arg0, %c0_i32 : i32, i32
  }
}

</mosaic_0001>

<llo_original>
// kernel: gnn_forward.3
$region0: #{gnn_forward.3}
  #allocation0 [shape = 'u32[]', space=smem, size = 0x4, offset = 0x4, fixed_abs, tag = 'smem constant byte address 0x4 - core index']
  #allocation1 [shape = 'u32[144,128]{1,0:T(1,128)}', space=vmem, size = 0x12000, scoped, tag = 'internal scratch']
  %s0 = inlined_call_operand.vmem [shape: bf16[128,128], index: 0, kind: input, shape index: {}]
  %s1 = inlined_call_operand.vmem [shape: bf16[128,128], index: 1, kind: input, shape index: {}]
  %s2 = inlined_call_operand.vmem [shape: bf16[128,128], index: 2, kind: input, shape index: {}]
  %s3 = inlined_call_operand.vmem [shape: bf16[128,128], index: 3, kind: input, shape index: {}]
  %s4 = inlined_call_operand.vmem [shape: f32[1,128], index: 4, kind: input, shape index: {}]
  %s5 = inlined_call_operand.vmem [shape: f32[128,128], index: 5, kind: output, shape index: {}]
  %s6 = sld [smem:[#allocation0]]
  $region30: #{gnn_forward.3} parent=0
    _
  %s8 = ssub.s32 1, %s6
  %s9 = scalar_select 0, %s8, %s6
  // Predicated region
  $region2: #{gnn_forward.3} parent=0 // pred_check
    _
  $region3: #{gnn_forward.3} parent=0 // pred_check_branch
    %11 = sbr.rel (0) target = $region5
  $region4: #{gnn_forward.3} parent=0 // pred_region
    _
  $region5: #{gnn_forward.3} parent=0 // pred_fallthru
    _
  // Predicated region
  $region6: #{gnn_forward.3} parent=0 // pred_check
    _
  $region7: #{gnn_forward.3} parent=0 // pred_check_branch
    %13 = sbr.rel (0) target = $region9
  $region8: #{gnn_forward.3} parent=0 // pred_region
    _
  $region9: #{gnn_forward.3} parent=0 // pred_fallthru
    _
  // Predicated region
  $region10: #{gnn_forward.3} parent=0 // pred_check
    _
  $region11: #{gnn_forward.3} parent=0 // pred_check_branch
    %15 = sbr.rel (0) target = $region13
  $region12: #{gnn_forward.3} parent=0 // pred_region
    _
  $region13: #{gnn_forward.3} parent=0 // pred_fallthru
    _
  // Predicated region
  $region14: #{gnn_forward.3} parent=0 // pred_check
    _
  $region15: #{gnn_forward.3} parent=0 // pred_check_branch
    %17 = sbr.rel (0) target = $region17
  $region16: #{gnn_forward.3} parent=0 // pred_region
    _
  $region17: #{gnn_forward.3} parent=0 // pred_fallthru
    _
  // Predicated region
  $region18: #{gnn_forward.3} parent=0 // pred_check
    _
  $region19: #{gnn_forward.3} parent=0 // pred_check_branch
    %19 = sbr.rel (0) target = $region21
  $region20: #{gnn_forward.3} parent=0 // pred_region
    _
  $region21: #{gnn_forward.3} parent=0 // pred_fallthru
    _
  %s21 = smul.u32 0, 128
  %v22 = vld [vmem:[%s0] sm:$0xf]
  %v23 = vld [vmem:[%s0 + $0x4] sm:$0xf]
  %v24 = vld [vmem:[%s0 + $0x8] sm:$0xf]
  %v25 = vld [vmem:[%s0 + $0xc] sm:$0xf]
  %v26 = vld [vmem:[%s0 + $0x10] sm:$0xf]
  %v27 = vld [vmem:[%s0 + $0x14] sm:$0xf]
  %v28 = vld [vmem:[%s0 + $0x18] sm:$0xf]
  %v29 = vld [vmem:[%s0 + $0x1c] sm:$0xf]
  %v30 = vld [vmem:[%s0 + $0x20] sm:$0xf]
  %v31 = vld [vmem:[%s0 + $0x24] sm:$0xf]
  %v32 = vld [vmem:[%s0 + $0x28] sm:$0xf]
  %v33 = vld [vmem:[%s0 + $0x2c] sm:$0xf]
  %v34 = vld [vmem:[%s0 + $0x30] sm:$0xf]
  %v35 = vld [vmem:[%s0 + $0x34] sm:$0xf]
  %v36 = vld [vmem:[%s0 + $0x38] sm:$0xf]
  %v37 = vld [vmem:[%s0 + $0x3c] sm:$0xf]
  %v38 = vld [vmem:[%s1] sm:$0xf]
  %v39 = vld [vmem:[%s1 + $0x4] sm:$0xf]
  %v40 = vld [vmem:[%s1 + $0x8] sm:$0xf]
  %v41 = vld [vmem:[%s1 + $0xc] sm:$0xf]
  %v42 = vld [vmem:[%s1 + $0x10] sm:$0xf]
  %v43 = vld [vmem:[%s1 + $0x14] sm:$0xf]
  %v44 = vld [vmem:[%s1 + $0x18] sm:$0xf]
  %v45 = vld [vmem:[%s1 + $0x1c] sm:$0xf]
  %v46 = vld [vmem:[%s1 + $0x20] sm:$0xf]
  %v47 = vld [vmem:[%s1 + $0x24] sm:$0xf]
  %v48 = vld [vmem:[%s1 + $0x28] sm:$0xf]
  %v49 = vld [vmem:[%s1 + $0x2c] sm:$0xf]
  %v50 = vld [vmem:[%s1 + $0x30] sm:$0xf]
  %v51 = vld [vmem:[%s1 + $0x34] sm:$0xf]
  %v52 = vld [vmem:[%s1 + $0x38] sm:$0xf]
  %v53 = vld [vmem:[%s1 + $0x3c] sm:$0xf]
  %v70 = vunpack.c.l.b16 %v22
  %v71 = vunpack.c.l.b16 %v23
  %v72 = vunpack.c.l.b16 %v24
  %v73 = vunpack.c.l.b16 %v25
  %v74 = vunpack.c.l.b16 %v26
  %v75 = vunpack.c.l.b16 %v27
  %v76 = vunpack.c.l.b16 %v28
  %v77 = vunpack.c.l.b16 %v29
  %v78 = vunpack.c.l.b16 %v30
  %v79 = vunpack.c.l.b16 %v31
  %v80 = vunpack.c.l.b16 %v32
  %v81 = vunpack.c.l.b16 %v33
  %v82 = vunpack.c.l.b16 %v34
  %v83 = vunpack.c.l.b16 %v35
  %v84 = vunpack.c.l.b16 %v36
  %v85 = vunpack.c.l.b16 %v37
  %v86 = vpack.c.b16 %v71, %v70
  %v87 = vpack.c.b16 %v73, %v72
  %v88 = vpack.c.b16 %v75, %v74
  %v89 = vpack.c.b16 %v77, %v76
  %v90 = vpack.c.b16 %v79, %v78
  %v91 = vpack.c.b16 %v81, %v80
  %v92 = vpack.c.b16 %v83, %v82
  %v93 = vpack.c.b16 %v85, %v84
  %v118 = vunpack.c.l.b16 %v38
  %v119 = vunpack.c.l.b16 %v39
  %v120 = vunpack.c.l.b16 %v40
  %v121 = vunpack.c.l.b16 %v41
  %v122 = vunpack.c.l.b16 %v42
  %v123 = vunpack.c.l.b16 %v43
  %v124 = vunpack.c.l.b16 %v44
  %v125 = vunpack.c.l.b16 %v45
  %v126 = vunpack.c.l.b16 %v46
  %v127 = vunpack.c.l.b16 %v47
  %v128 = vunpack.c.l.b16 %v48
  %v129 = vunpack.c.l.b16 %v49
  %v130 = vunpack.c.l.b16 %v50
  %v131 = vunpack.c.l.b16 %v51
  %v132 = vunpack.c.l.b16 %v52
  %v133 = vunpack.c.l.b16 %v53
  %v134 = vpack.c.b16 %v119, %v118
  %v135 = vpack.c.b16 %v121, %v120
  %v136 = vpack.c.b16 %v123, %v122
  %v137 = vpack.c.b16 %v125, %v124
  %v138 = vpack.c.b16 %v127, %v126
  %v139 = vpack.c.b16 %v129, %v128
  %v140 = vpack.c.b16 %v131, %v130
  %v141 = vpack.c.b16 %v133, %v132
  %150 = vmatprep.subr.bf16.mxu0 0
  %151 = vmatpush1.bf16.msra.mxu0 %v141
  %152 = vmatprep.subr.bf16.mxu0 0
  %153 = vmatpush1.bf16.msra.mxu0 %v140
  %154 = vmatprep.subr.bf16.mxu0 0
  %155 = vmatpush1.bf16.msra.mxu0 %v139
  %156 = vmatprep.subr.bf16.mxu0 0
  %157 = vmatpush1.bf16.msra.mxu0 %v138
  %158 = vmatprep.subr.bf16.mxu0 0
  %159 = vmatpush1.bf16.msra.mxu0 %v137
  %160 = vmatprep.subr.bf16.mxu0 0
  %161 = vmatpush1.bf16.msra.mxu0 %v136
  %162 = vmatprep.subr.bf16.mxu0 0
  %163 = vmatpush1.bf16.msra.mxu0 %v135
  %164 = vmatprep.subr.bf16.mxu0 0
  %165 = vmatpush1.bf16.msra.mxu0 %v134
  %166 = vmatprep.subr.bf16.mxu0 0
  %167 = vmatpush2.bf16.msra.mxu0 0
  %168 = vmatprep.subr.bf16.mxu0 0
  %169 = vmatpush2.bf16.msra.mxu0 0
  %170 = vmatprep.subr.bf16.mxu0 0
  %171 = vmatpush2.bf16.msra.mxu0 0
  %172 = vmatprep.subr.bf16.mxu0 0
  %173 = vmatpush2.bf16.msra.mxu0 0
  %174 = vmatprep.subr.bf16.mxu0 0
  %175 = vmatpush2.bf16.msra.mxu0 0
  %176 = vmatprep.subr.bf16.mxu0 0
  %177 = vmatpush2.bf16.msra.mxu0 0
  %178 = vmatprep.subr.bf16.mxu0 0
  %179 = vmatpush2.bf16.msra.mxu0 0
  %180 = vmatprep.subr.bf16.mxu0 0
  %181 = vmatpush2.bf16.msra.mxu0 0
  %182 = vmatprep.mubr.bf16.mxu0 0
  %183 = vmatmul.mubr.bf16.gmra.mxu0 %v86
  %v184 = vpop.f32.mrf.mxu0
  %v185 = vadd.f32 0.0, %v184
  %v186 = vpop.f32.mrf.mxu0
  %v187 = vpop.f32.mrf.mxu0
  %v188 = vadd.f32 0.0, %v187
  %v189 = vpop.f32.mrf.mxu0
  %190 = vmatprep.mubr.bf16.mxu0 0
  %191 = vmatmul.mubr.bf16.gmra.mxu0 %v87
  %v192 = vpop.f32.mrf.mxu0
  %v193 = vadd.f32 0.0, %v192
  %v194 = vpop.f32.mrf.mxu0
  %v195 = vpop.f32.mrf.mxu0
  %v196 = vadd.f32 0.0, %v195
  %v197 = vpop.f32.mrf.mxu0
  %198 = vmatprep.mubr.bf16.mxu0 0
  %199 = vmatmul.mubr.bf16.gmra.mxu0 %v88
  %v200 = vpop.f32.mrf.mxu0
  %v201 = vadd.f32 0.0, %v200
  %v202 = vpop.f32.mrf.mxu0
  %v203 = vpop.f32.mrf.mxu0
  %v204 = vadd.f32 0.0, %v203
  %v205 = vpop.f32.mrf.mxu0
  %206 = vmatprep.mubr.bf16.mxu0 0
  %207 = vmatmul.mubr.bf16.gmra.mxu0 %v89
  %v208 = vpop.f32.mrf.mxu0
  %v209 = vadd.f32 0.0, %v208
  %v210 = vpop.f32.mrf.mxu0
  %v211 = vpop.f32.mrf.mxu0
  %v212 = vadd.f32 0.0, %v211
  %v213 = vpop.f32.mrf.mxu0
  %214 = vmatprep.mubr.bf16.mxu0 0
  %215 = vmatmul.mubr.bf16.gmra.mxu0 %v90
  %v216 = vpop.f32.mrf.mxu0
  %v217 = vadd.f32 0.0, %v216
  %v218 = vpop.f32.mrf.mxu0
  %v219 = vpop.f32.mrf.mxu0
  %v220 = vadd.f32 0.0, %v219
  %v221 = vpop.f32.mrf.mxu0
  %222 = vmatprep.mubr.bf16.mxu0 0
  %223 = vmatmul.mubr.bf16.gmra.mxu0 %v91
  %v224 = vpop.f32.mrf.mxu0
  %v225 = vadd.f32 0.0, %v224
  %v226 = vpop.f32.mrf.mxu0
  %v227 = vpop.f32.mrf.mxu0
  %v228 = vadd.f32 0.0, %v227
  %v229 = vpop.f32.mrf.mxu0
  %230 = vmatprep.mubr.bf16.mxu0 0
  %231 = vmatmul.mubr.bf16.gmra.mxu0 %v92
  %v232 = vpop.f32.mrf.mxu0
  %v233 = vadd.f32 0.0, %v232
  %v234 = vpop.f32.mrf.mxu0
  %v235 = vpop.f32.mrf.mxu0
  %v236 = vadd.f32 0.0, %v235
  %v237 = vpop.f32.mrf.mxu0
  %238 = vmatprep.mubr.bf16.mxu0 0
  %239 = vmatmul.mubr.bf16.gmra.mxu0 %v93
  %v240 = vpop.f32.mrf.mxu0
  %v241 = vadd.f32 0.0, %v240
  %v242 = vpop.f32.mrf.mxu0
  %v243 = vpop.f32.mrf.mxu0
  %v244 = vadd.f32 0.0, %v243
  %v245 = vpop.f32.mrf.mxu0
  %246 = vdwg.mxu0
  %v247 = vpack.c.bf16 %v188, %v185
  %v248 = vpack.c.bf16 %v196, %v193
  %v249 = vpack.c.bf16 %v204, %v201
  %v250 = vpack.c.bf16 %v212, %v209
  %v251 = vpack.c.bf16 %v220, %v217
  %v252 = vpack.c.bf16 %v228, %v225
  %v253 = vpack.c.bf16 %v236, %v233
  %v254 = vpack.c.bf16 %v244, %v241
  %v255 = vld [vmem:[%s2] sm:$0xf]
  %v256 = vld [vmem:[%s2 + $0x4] sm:$0xf]
  %v257 = vld [vmem:[%s2 + $0x8] sm:$0xf]
  %v258 = vld [vmem:[%s2 + $0xc] sm:$0xf]
  %v259 = vld [vmem:[%s2 + $0x10] sm:$0xf]
  %v260 = vld [vmem:[%s2 + $0x14] sm:$0xf]
  %v261 = vld [vmem:[%s2 + $0x18] sm:$0xf]
  %v262 = vld [vmem:[%s2 + $0x1c] sm:$0xf]
  %v263 = vld [vmem:[%s2 + $0x20] sm:$0xf]
  %v264 = vld [vmem:[%s2 + $0x24] sm:$0xf]
  %v265 = vld [vmem:[%s2 + $0x28] sm:$0xf]
  %v266 = vld [vmem:[%s2 + $0x2c] sm:$0xf]
  %v267 = vld [vmem:[%s2 + $0x30] sm:$0xf]
  %v268 = vld [vmem:[%s2 + $0x34] sm:$0xf]
  %v269 = vld [vmem:[%s2 + $0x38] sm:$0xf]
  %v270 = vld [vmem:[%s2 + $0x3c] sm:$0xf]
  %s271 = sshra.s32 %s21, 3
  %s272 = sand.u32 %s21, 7
  %s273 = smul.addr %s271, 4
  %s274 = scalar_lea.vmem %s1, %s273
  %v275 = vld [vmem:[%s274] sm:$0xf]
  %v276 = vld [vmem:[%s274 + $0x4] sm:$0xf]
  %v277 = vld [vmem:[%s274 + $0x8] sm:$0xf]
  %v278 = vld [vmem:[%s274 + $0xc] sm:$0xf]
  %v279 = vld [vmem:[%s274 + $0x10] sm:$0xf]
  %v280 = vld [vmem:[%s274 + $0x14] sm:$0xf]
  %v281 = vld [vmem:[%s274 + $0x18] sm:$0xf]
  %v282 = vld [vmem:[%s274 + $0x1c] sm:$0xf]
  %v283 = vld [vmem:[%s274 + $0x20] sm:$0xf]
  %v284 = vld [vmem:[%s274 + $0x24] sm:$0xf]
  %v285 = vld [vmem:[%s274 + $0x28] sm:$0xf]
  %v286 = vld [vmem:[%s274 + $0x2c] sm:$0xf]
  %v287 = vld [vmem:[%s274 + $0x30] sm:$0xf]
  %v288 = vld [vmem:[%s274 + $0x34] sm:$0xf]
  %v289 = vld [vmem:[%s274 + $0x38] sm:$0xf]
  %v290 = vld [vmem:[%s274 + $0x3c] sm:$0xf]
  %v291 = vld [vmem:[%s3] sm:$0xf]
  %v292 = vld [vmem:[%s3 + $0x4] sm:$0xf]
  %v293 = vld [vmem:[%s3 + $0x8] sm:$0xf]
  %v294 = vld [vmem:[%s3 + $0xc] sm:$0xf]
  %v295 = vld [vmem:[%s3 + $0x10] sm:$0xf]
  %v296 = vld [vmem:[%s3 + $0x14] sm:$0xf]
  %v297 = vld [vmem:[%s3 + $0x18] sm:$0xf]
  %v298 = vld [vmem:[%s3 + $0x1c] sm:$0xf]
  %v299 = vld [vmem:[%s3 + $0x20] sm:$0xf]
  %v300 = vld [vmem:[%s3 + $0x24] sm:$0xf]
  %v301 = vld [vmem:[%s3 + $0x28] sm:$0xf]
  %v302 = vld [vmem:[%s3 + $0x2c] sm:$0xf]
  %v303 = vld [vmem:[%s3 + $0x30] sm:$0xf]
  %v304 = vld [vmem:[%s3 + $0x34] sm:$0xf]
  %v305 = vld [vmem:[%s3 + $0x38] sm:$0xf]
  %v306 = vld [vmem:[%s3 + $0x3c] sm:$0xf]
  %v323 = vunpack.c.l.b16 %v275
  %v324 = vunpack.c.l.b16 %v276
  %v325 = vunpack.c.l.b16 %v277
  %v326 = vunpack.c.l.b16 %v278
  %v327 = vunpack.c.l.b16 %v279
  %v328 = vunpack.c.l.b16 %v280
  %v329 = vunpack.c.l.b16 %v281
  %v330 = vunpack.c.l.b16 %v282
  %v331 = vunpack.c.l.b16 %v283
  %v332 = vunpack.c.l.b16 %v284
  %v333 = vunpack.c.l.b16 %v285
  %v334 = vunpack.c.l.b16 %v286
  %v335 = vunpack.c.l.b16 %v287
  %v336 = vunpack.c.l.b16 %v288
  %v337 = vunpack.c.l.b16 %v289
  %v338 = vunpack.c.l.b16 %v290
  %v339 = vpack.c.b16 %v324, %v323
  %v340 = vpack.c.b16 %v326, %v325
  %v341 = vpack.c.b16 %v328, %v327
  %v342 = vpack.c.b16 %v330, %v329
  %v343 = vpack.c.b16 %v332, %v331
  %v344 = vpack.c.b16 %v334, %v333
  %v345 = vpack.c.b16 %v336, %v335
  %v346 = vpack.c.b16 %v338, %v337
  %v371 = vunpack.c.l.b16 %v291
  %v372 = vunpack.c.l.b16 %v292
  %v373 = vunpack.c.l.b16 %v293
  %v374 = vunpack.c.l.b16 %v294
  %v375 = vunpack.c.l.b16 %v295
  %v376 = vunpack.c.l.b16 %v296
  %v377 = vunpack.c.l.b16 %v297
  %v378 = vunpack.c.l.b16 %v298
  %v379 = vunpack.c.l.b16 %v299
  %v380 = vunpack.c.l.b16 %v300
  %v381 = vunpack.c.l.b16 %v301
  %v382 = vunpack.c.l.b16 %v302
  %v383 = vunpack.c.l.b16 %v303
  %v384 = vunpack.c.l.b16 %v304
  %v385 = vunpack.c.l.b16 %v305
  %v386 = vunpack.c.l.b16 %v306
  %v387 = vpack.c.b16 %v372, %v371
  %v388 = vpack.c.b16 %v374, %v373
  %v389 = vpack.c.b16 %v376, %v375
  %v390 = vpack.c.b16 %v378, %v377
  %v391 = vpack.c.b16 %v380, %v379
  %v392 = vpack.c.b16 %v382, %v381
  %v393 = vpack.c.b16 %v384, %v383
  %v394 = vpack.c.b16 %v386, %v385
  %403 = vmatprep.subr.bf16.mxu0 0
  %404 = vmatpush1.bf16.msra.mxu0 %v394
  %405 = vmatprep.subr.bf16.mxu0 0
  %406 = vmatpush1.bf16.msra.mxu0 %v393
  %407 = vmatprep.subr.bf16.mxu0 0
  %408 = vmatpush1.bf16.msra.mxu0 %v392
  %409 = vmatprep.subr.bf16.mxu0 0
  %410 = vmatpush1.bf16.msra.mxu0 %v391
  %411 = vmatprep.subr.bf16.mxu0 0
  %412 = vmatpush1.bf16.msra.mxu0 %v390
  %413 = vmatprep.subr.bf16.mxu0 0
  %414 = vmatpush1.bf16.msra.mxu0 %v389
  %415 = vmatprep.subr.bf16.mxu0 0
  %416 = vmatpush1.bf16.msra.mxu0 %v388
  %417 = vmatprep.subr.bf16.mxu0 0
  %418 = vmatpush1.bf16.msra.mxu0 %v387
  %419 = vmatprep.subr.bf16.mxu0 0
  %420 = vmatpush2.bf16.msra.mxu0 0
  %421 = vmatprep.subr.bf16.mxu0 0
  %422 = vmatpush2.bf16.msra.mxu0 0
  %423 = vmatprep.subr.bf16.mxu0 0
  %424 = vmatpush2.bf16.msra.mxu0 0
  %425 = vmatprep.subr.bf16.mxu0 0
  %426 = vmatpush2.bf16.msra.mxu0 0
  %427 = vmatprep.subr.bf16.mxu0 0
  %428 = vmatpush2.bf16.msra.mxu0 0
  %429 = vmatprep.subr.bf16.mxu0 0
  %430 = vmatpush2.bf16.msra.mxu0 0
  %431 = vmatprep.subr.bf16.mxu0 0
  %432 = vmatpush2.bf16.msra.mxu0 0
  %433 = vmatprep.subr.bf16.mxu0 0
  %434 = vmatpush2.bf16.msra.mxu0 0
  %435 = vmatprep.mubr.bf16.mxu0 0
  %436 = vmatmul.mubr.bf16.gmra.mxu0 %v339
  %v437 = vpop.f32.mrf.mxu0
  %v438 = vadd.f32 0.0, %v437
  %v439 = vpop.f32.mrf.mxu0
  %v440 = vpop.f32.mrf.mxu0
  %v441 = vadd.f32 0.0, %v440
  %v442 = vpop.f32.mrf.mxu0
  %443 = vmatprep.mubr.bf16.mxu0 0
  %444 = vmatmul.mubr.bf16.gmra.mxu0 %v340
  %v445 = vpop.f32.mrf.mxu0
  %v446 = vadd.f32 0.0, %v445
  %v447 = vpop.f32.mrf.mxu0
  %v448 = vpop.f32.mrf.mxu0
  %v449 = vadd.f32 0.0, %v448
  %v450 = vpop.f32.mrf.mxu0
  %451 = vmatprep.mubr.bf16.mxu0 0
  %452 = vmatmul.mubr.bf16.gmra.mxu0 %v341
  %v453 = vpop.f32.mrf.mxu0
  %v454 = vadd.f32 0.0, %v453
  %v455 = vpop.f32.mrf.mxu0
  %v456 = vpop.f32.mrf.mxu0
  %v457 = vadd.f32 0.0, %v456
  %v458 = vpop.f32.mrf.mxu0
  %459 = vmatprep.mubr.bf16.mxu0 0
  %460 = vmatmul.mubr.bf16.gmra.mxu0 %v342
  %v461 = vpop.f32.mrf.mxu0
  %v462 = vadd.f32 0.0, %v461
  %v463 = vpop.f32.mrf.mxu0
  %v464 = vpop.f32.mrf.mxu0
  %v465 = vadd.f32 0.0, %v464
  %v466 = vpop.f32.mrf.mxu0
  %467 = vmatprep.mubr.bf16.mxu0 0
  %468 = vmatmul.mubr.bf16.gmra.mxu0 %v343
  %v469 = vpop.f32.mrf.mxu0
  %v470 = vadd.f32 0.0, %v469
  %v471 = vpop.f32.mrf.mxu0
  %v472 = vpop.f32.mrf.mxu0
  %v473 = vadd.f32 0.0, %v472
  %v474 = vpop.f32.mrf.mxu0
  %475 = vmatprep.mubr.bf16.mxu0 0
  %476 = vmatmul.mubr.bf16.gmra.mxu0 %v344
  %v477 = vpop.f32.mrf.mxu0
  %v478 = vadd.f32 0.0, %v477
  %v479 = vpop.f32.mrf.mxu0
  %v480 = vpop.f32.mrf.mxu0
  %v481 = vadd.f32 0.0, %v480
  %v482 = vpop.f32.mrf.mxu0
  %483 = vmatprep.mubr.bf16.mxu0 0
  %484 = vmatmul.mubr.bf16.gmra.mxu0 %v345
  %v485 = vpop.f32.mrf.mxu0
  %v486 = vadd.f32 0.0, %v485
  %v487 = vpop.f32.mrf.mxu0
  %v488 = vpop.f32.mrf.mxu0
  %v489 = vadd.f32 0.0, %v488
  %v490 = vpop.f32.mrf.mxu0
  %491 = vmatprep.mubr.bf16.mxu0 0
  %492 = vmatmul.mubr.bf16.gmra.mxu0 %v346
  %v493 = vpop.f32.mrf.mxu0
  %v494 = vadd.f32 0.0, %v493
  %v495 = vpop.f32.mrf.mxu0
  %v496 = vpop.f32.mrf.mxu0
  %v497 = vadd.f32 0.0, %v496
  %v498 = vpop.f32.mrf.mxu0
  %499 = vdwg.mxu0
  %v516 = vunpack.c.l.b16 %v255
  %v517 = vunpack.c.l.b16 %v256
  %v518 = vunpack.c.l.b16 %v257
  %v519 = vunpack.c.l.b16 %v258
  %v520 = vunpack.c.l.b16 %v259
  %v521 = vunpack.c.l.b16 %v260
  %v522 = vunpack.c.l.b16 %v261
  %v523 = vunpack.c.l.b16 %v262
  %v524 = vunpack.c.l.b16 %v263
  %v525 = vunpack.c.l.b16 %v264
  %v526 = vunpack.c.l.b16 %v265
  %v527 = vunpack.c.l.b16 %v266
  %v528 = vunpack.c.l.b16 %v267
  %v529 = vunpack.c.l.b16 %v268
  %v530 = vunpack.c.l.b16 %v269
  %v531 = vunpack.c.l.b16 %v270
  %v532 = vpack.c.b16 %v517, %v516
  %v533 = vpack.c.b16 %v519, %v518
  %v534 = vpack.c.b16 %v521, %v520
  %v535 = vpack.c.b16 %v523, %v522
  %v536 = vpack.c.b16 %v525, %v524
  %v537 = vpack.c.b16 %v527, %v526
  %v538 = vpack.c.b16 %v529, %v528
  %v539 = vpack.c.b16 %v531, %v530
  %548 = vmatprep.subr.bf16.mxu0 0
  %549 = vmatpush1.bf16.msra.mxu0 %v539
  %550 = vmatprep.subr.bf16.mxu0 0
  %551 = vmatpush1.bf16.msra.mxu0 %v538
  %552 = vmatprep.subr.bf16.mxu0 0
  %553 = vmatpush1.bf16.msra.mxu0 %v537
  %554 = vmatprep.subr.bf16.mxu0 0
  %555 = vmatpush1.bf16.msra.mxu0 %v536
  %556 = vmatprep.subr.bf16.mxu0 0
  %557 = vmatpush1.bf16.msra.mxu0 %v535
  %558 = vmatprep.subr.bf16.mxu0 0
  %559 = vmatpush1.bf16.msra.mxu0 %v534
  %560 = vmatprep.subr.bf16.mxu0 0
  %561 = vmatpush1.bf16.msra.mxu0 %v533
  %562 = vmatprep.subr.bf16.mxu0 0
  %563 = vmatpush1.bf16.msra.mxu0 %v532
  %564 = vmatprep.subr.bf16.mxu0 0
  %565 = vmatpush2.bf16.msra.mxu0 0
  %566 = vmatprep.subr.bf16.mxu0 0
  %567 = vmatpush2.bf16.msra.mxu0 0
  %568 = vmatprep.subr.bf16.mxu0 0
  %569 = vmatpush2.bf16.msra.mxu0 0
  %570 = vmatprep.subr.bf16.mxu0 0
  %571 = vmatpush2.bf16.msra.mxu0 0
  %572 = vmatprep.subr.bf16.mxu0 0
  %573 = vmatpush2.bf16.msra.mxu0 0
  %574 = vmatprep.subr.bf16.mxu0 0
  %575 = vmatpush2.bf16.msra.mxu0 0
  %576 = vmatprep.subr.bf16.mxu0 0
  %577 = vmatpush2.bf16.msra.mxu0 0
  %578 = vmatprep.subr.bf16.mxu0 0
  %579 = vmatpush2.bf16.msra.mxu0 0
  %580 = vmatprep.mubr.bf16.mxu0 0
  %581 = vmatmul.mubr.bf16.gmra.mxu0 %v247
  %v582 = vpop.f32.mrf.mxu0
  %v583 = vadd.f32 %v438, %v582
  %v584 = vpop.f32.mrf.mxu0
  %v585 = vpop.f32.mrf.mxu0
  %v586 = vadd.f32 %v441, %v585
  %v587 = vpop.f32.mrf.mxu0
  %588 = vmatprep.mubr.bf16.mxu0 0
  %589 = vmatmul.mubr.bf16.gmra.mxu0 %v248
  %v590 = vpop.f32.mrf.mxu0
  %v591 = vadd.f32 %v446, %v590
  %v592 = vpop.f32.mrf.mxu0
  %v593 = vpop.f32.mrf.mxu0
  %v594 = vadd.f32 %v449, %v593
  %v595 = vpop.f32.mrf.mxu0
  %596 = vmatprep.mubr.bf16.mxu0 0
  %597 = vmatmul.mubr.bf16.gmra.mxu0 %v249
  %v598 = vpop.f32.mrf.mxu0
  %v599 = vadd.f32 %v454, %v598
  %v600 = vpop.f32.mrf.mxu0
  %v601 = vpop.f32.mrf.mxu0
  %v602 = vadd.f32 %v457, %v601
  %v603 = vpop.f32.mrf.mxu0
  %604 = vmatprep.mubr.bf16.mxu0 0
  %605 = vmatmul.mubr.bf16.gmra.mxu0 %v250
  %v606 = vpop.f32.mrf.mxu0
  %v607 = vadd.f32 %v462, %v606
  %v608 = vpop.f32.mrf.mxu0
  %v609 = vpop.f32.mrf.mxu0
  %v610 = vadd.f32 %v465, %v609
  %v611 = vpop.f32.mrf.mxu0
  %612 = vmatprep.mubr.bf16.mxu0 0
  %613 = vmatmul.mubr.bf16.gmra.mxu0 %v251
  %v614 = vpop.f32.mrf.mxu0
  %v615 = vadd.f32 %v470, %v614
  %v616 = vpop.f32.mrf.mxu0
  %v617 = vpop.f32.mrf.mxu0
  %v618 = vadd.f32 %v473, %v617
  %v619 = vpop.f32.mrf.mxu0
  %620 = vmatprep.mubr.bf16.mxu0 0
  %621 = vmatmul.mubr.bf16.gmra.mxu0 %v252
  %v622 = vpop.f32.mrf.mxu0
  %v623 = vadd.f32 %v478, %v622
  %v624 = vpop.f32.mrf.mxu0
  %v625 = vpop.f32.mrf.mxu0
  %v626 = vadd.f32 %v481, %v625
  %v627 = vpop.f32.mrf.mxu0
  %628 = vmatprep.mubr.bf16.mxu0 0
  %629 = vmatmul.mubr.bf16.gmra.mxu0 %v253
  %v630 = vpop.f32.mrf.mxu0
  %v631 = vadd.f32 %v486, %v630
  %v632 = vpop.f32.mrf.mxu0
  %v633 = vpop.f32.mrf.mxu0
  %v634 = vadd.f32 %v489, %v633
  %v635 = vpop.f32.mrf.mxu0
  %636 = vmatprep.mubr.bf16.mxu0 0
  %637 = vmatmul.mubr.bf16.gmra.mxu0 %v254
  %v638 = vpop.f32.mrf.mxu0
  %v639 = vadd.f32 %v494, %v638
  %v640 = vpop.f32.mrf.mxu0
  %v641 = vpop.f32.mrf.mxu0
  %v642 = vadd.f32 %v497, %v641
  %v643 = vpop.f32.mrf.mxu0
  %644 = vdwg.mxu0
  %v645 = vld [vmem:[%s4] sm:$0x1]
  %v647 = vlaneseq
  %v648 = vshrl.u32 %v647, 7
  %v649 = vsub.s32 0, %v648
  %v650 = vrot.slane %v645, %v649
  %v652 = vadd.f32 %v583, %v650
  %v653 = vadd.f32 %v586, %v650
  %v654 = vadd.f32 %v591, %v650
  %v655 = vadd.f32 %v594, %v650
  %v656 = vadd.f32 %v599, %v650
  %v657 = vadd.f32 %v602, %v650
  %v658 = vadd.f32 %v607, %v650
  %v659 = vadd.f32 %v610, %v650
  %v660 = vadd.f32 %v615, %v650
  %v661 = vadd.f32 %v618, %v650
  %v662 = vadd.f32 %v623, %v650
  %v663 = vadd.f32 %v626, %v650
  %v664 = vadd.f32 %v631, %v650
  %v665 = vadd.f32 %v634, %v650
  %v666 = vadd.f32 %v639, %v650
  %v667 = vadd.f32 %v642, %v650
  %668 = vst [vmem:[%s5] sm:$0xff] %v652
  %669 = vst [vmem:[%s5 + $0x8] sm:$0xff] %v653
  %670 = vst [vmem:[%s5 + $0x10] sm:$0xff] %v654
  %671 = vst [vmem:[%s5 + $0x18] sm:$0xff] %v655
  %672 = vst [vmem:[%s5 + $0x20] sm:$0xff] %v656
  %673 = vst [vmem:[%s5 + $0x28] sm:$0xff] %v657
  %674 = vst [vmem:[%s5 + $0x30] sm:$0xff] %v658
  %675 = vst [vmem:[%s5 + $0x38] sm:$0xff] %v659
  %676 = vst [vmem:[%s5 + $0x40] sm:$0xff] %v660
  %677 = vst [vmem:[%s5 + $0x48] sm:$0xff] %v661
  %678 = vst [vmem:[%s5 + $0x50] sm:$0xff] %v662
  %679 = vst [vmem:[%s5 + $0x58] sm:$0xff] %v663
  %680 = vst [vmem:[%s5 + $0x60] sm:$0xff] %v664
  %681 = vst [vmem:[%s5 + $0x68] sm:$0xff] %v665
  %682 = vst [vmem:[%s5 + $0x70] sm:$0xff] %v666
  %683 = vst [vmem:[%s5 + $0x78] sm:$0xff] %v667
  // Predicated region
  $region22: #{gnn_forward.3} parent=0 // pred_check
    _
  $region23: #{gnn_forward.3} parent=0 // pred_check_branch
    %685 = sbr.rel (0) target = $region25
  $region24: #{gnn_forward.3} parent=0 // pred_region
    _
  $region25: #{gnn_forward.3} parent=0 // pred_fallthru
    _
  // Predicated region
  $region26: #{gnn_forward.3} parent=0 // pred_check
    _
  $region27: #{gnn_forward.3} parent=0 // pred_check_branch
    %687 = sbr.rel (0) target = $region29
  $region28: #{gnn_forward.3} parent=0 // pred_region
    _
  $region29: #{gnn_forward.3} parent=0 // pred_fallthru
    _

// kernel: gnn_forward.2
$region0: #{gnn_forward.2}
  #allocation0 [shape = 'u32[]', space=smem, size = 0x4, offset = 0x4, fixed_abs, tag = 'smem constant byte address 0x4 - core index']
  #allocation1 [shape = 'u32[144,128]{1,0:T(1,128)}', space=vmem, size = 0x12000, scoped, tag = 'internal scratch']
  %s0 = inlined_call_operand.vmem [shape: bf16[128,128], index: 0, kind: input, shape index: {}]
  %s1 = inlined_call_operand.vmem [shape: bf16[128,128], index: 1, kind: input, shape index: {}]
  %s2 = inlined_call_operand.vmem [shape: bf16[128,128], index: 2, kind: input, shape index: {}]
  %s3 = inlined_call_operand.vmem [shape: bf16[128,128], index: 3, kind: input, shape index: {}]
  %s4 = inlined_call_operand.vmem [shape: f32[1,128], index: 4, kind: input, shape index: {}]
  %s5 = inlined_call_operand.vmem [shape: bf16[128,128], index: 5, kind: output, shape index: {}]
  %s6 = sld [smem:[#allocation0]]
  $region30: #{gnn_forward.2} parent=0
    _
  %s8 = ssub.s32 1, %s6
  %s9 = scalar_select 0, %s8, %s6
  // Predicated region
  $region2: #{gnn_forward.2} parent=0 // pred_check
    _
  $region3: #{gnn_forward.2} parent=0 // pred_check_branch
    %11 = sbr.rel (0) target = $region5
  $region4: #{gnn_forward.2} parent=0 // pred_region
    _
  $region5: #{gnn_forward.2} parent=0 // pred_fallthru
    _
  // Predicated region
  $region6: #{gnn_forward.2} parent=0 // pred_check
    _
  $region7: #{gnn_forward.2} parent=0 // pred_check_branch
    %13 = sbr.rel (0) target = $region9
  $region8: #{gnn_forward.2} parent=0 // pred_region
    _
  $region9: #{gnn_forward.2} parent=0 // pred_fallthru
    _
  // Predicated region
  $region10: #{gnn_forward.2} parent=0 // pred_check
    _
  $region11: #{gnn_forward.2} parent=0 // pred_check_branch
    %15 = sbr.rel (0) target = $region13
  $region12: #{gnn_forward.2} parent=0 // pred_region
    _
  $region13: #{gnn_forward.2} parent=0 // pred_fallthru
    _
  // Predicated region
  $region14: #{gnn_forward.2} parent=0 // pred_check
    _
  $region15: #{gnn_forward.2} parent=0 // pred_check_branch
    %17 = sbr.rel (0) target = $region17
  $region16: #{gnn_forward.2} parent=0 // pred_region
    _
  $region17: #{gnn_forward.2} parent=0 // pred_fallthru
    _
  // Predicated region
  $region18: #{gnn_forward.2} parent=0 // pred_check
    _
  $region19: #{gnn_forward.2} parent=0 // pred_check_branch
    %19 = sbr.rel (0) target = $region21
  $region20: #{gnn_forward.2} parent=0 // pred_region
    _
  $region21: #{gnn_forward.2} parent=0 // pred_fallthru
    _
  %s21 = smul.u32 0, 128
  %v22 = vld [vmem:[%s0] sm:$0xf]
  %v23 = vld [vmem:[%s0 + $0x4] sm:$0xf]
  %v24 = vld [vmem:[%s0 + $0x8] sm:$0xf]
  %v25 = vld [vmem:[%s0 + $0xc] sm:$0xf]
  %v26 = vld [vmem:[%s0 + $0x10] sm:$0xf]
  %v27 = vld [vmem:[%s0 + $0x14] sm:$0xf]
  %v28 = vld [vmem:[%s0 + $0x18] sm:$0xf]
  %v29 = vld [vmem:[%s0 + $0x1c] sm:$0xf]
  %v30 = vld [vmem:[%s0 + $0x20] sm:$0xf]
  %v31 = vld [vmem:[%s0 + $0x24] sm:$0xf]
  %v32 = vld [vmem:[%s0 + $0x28] sm:$0xf]
  %v33 = vld [vmem:[%s0 + $0x2c] sm:$0xf]
  %v34 = vld [vmem:[%s0 + $0x30] sm:$0xf]
  %v35 = vld [vmem:[%s0 + $0x34] sm:$0xf]
  %v36 = vld [vmem:[%s0 + $0x38] sm:$0xf]
  %v37 = vld [vmem:[%s0 + $0x3c] sm:$0xf]
  %v38 = vld [vmem:[%s1] sm:$0xf]
  %v39 = vld [vmem:[%s1 + $0x4] sm:$0xf]
  %v40 = vld [vmem:[%s1 + $0x8] sm:$0xf]
  %v41 = vld [vmem:[%s1 + $0xc] sm:$0xf]
  %v42 = vld [vmem:[%s1 + $0x10] sm:$0xf]
  %v43 = vld [vmem:[%s1 + $0x14] sm:$0xf]
  %v44 = vld [vmem:[%s1 + $0x18] sm:$0xf]
  %v45 = vld [vmem:[%s1 + $0x1c] sm:$0xf]
  %v46 = vld [vmem:[%s1 + $0x20] sm:$0xf]
  %v47 = vld [vmem:[%s1 + $0x24] sm:$0xf]
  %v48 = vld [vmem:[%s1 + $0x28] sm:$0xf]
  %v49 = vld [vmem:[%s1 + $0x2c] sm:$0xf]
  %v50 = vld [vmem:[%s1 + $0x30] sm:$0xf]
  %v51 = vld [vmem:[%s1 + $0x34] sm:$0xf]
  %v52 = vld [vmem:[%s1 + $0x38] sm:$0xf]
  %v53 = vld [vmem:[%s1 + $0x3c] sm:$0xf]
  %v70 = vunpack.c.l.b16 %v22
  %v71 = vunpack.c.l.b16 %v23
  %v72 = vunpack.c.l.b16 %v24
  %v73 = vunpack.c.l.b16 %v25
  %v74 = vunpack.c.l.b16 %v26
  %v75 = vunpack.c.l.b16 %v27
  %v76 = vunpack.c.l.b16 %v28
  %v77 = vunpack.c.l.b16 %v29
  %v78 = vunpack.c.l.b16 %v30
  %v79 = vunpack.c.l.b16 %v31
  %v80 = vunpack.c.l.b16 %v32
  %v81 = vunpack.c.l.b16 %v33
  %v82 = vunpack.c.l.b16 %v34
  %v83 = vunpack.c.l.b16 %v35
  %v84 = vunpack.c.l.b16 %v36
  %v85 = vunpack.c.l.b16 %v37
  %v86 = vpack.c.b16 %v71, %v70
  %v87 = vpack.c.b16 %v73, %v72
  %v88 = vpack.c.b16 %v75, %v74
  %v89 = vpack.c.b16 %v77, %v76
  %v90 = vpack.c.b16 %v79, %v78
  %v91 = vpack.c.b16 %v81, %v80
  %v92 = vpack.c.b16 %v83, %v82
  %v93 = vpack.c.b16 %v85, %v84
  %v118 = vunpack.c.l.b16 %v38
  %v119 = vunpack.c.l.b16 %v39
  %v120 = vunpack.c.l.b16 %v40
  %v121 = vunpack.c.l.b16 %v41
  %v122 = vunpack.c.l.b16 %v42
  %v123 = vunpack.c.l.b16 %v43
  %v124 = vunpack.c.l.b16 %v44
  %v125 = vunpack.c.l.b16 %v45
  %v126 = vunpack.c.l.b16 %v46
  %v127 = vunpack.c.l.b16 %v47
  %v128 = vunpack.c.l.b16 %v48
  %v129 = vunpack.c.l.b16 %v49
  %v130 = vunpack.c.l.b16 %v50
  %v131 = vunpack.c.l.b16 %v51
  %v132 = vunpack.c.l.b16 %v52
  %v133 = vunpack.c.l.b16 %v53
  %v134 = vpack.c.b16 %v119, %v118
  %v135 = vpack.c.b16 %v121, %v120
  %v136 = vpack.c.b16 %v123, %v122
  %v137 = vpack.c.b16 %v125, %v124
  %v138 = vpack.c.b16 %v127, %v126
  %v139 = vpack.c.b16 %v129, %v128
  %v140 = vpack.c.b16 %v131, %v130
  %v141 = vpack.c.b16 %v133, %v132
  %150 = vmatprep.subr.bf16.mxu0 0
  %151 = vmatpush1.bf16.msra.mxu0 %v141
  %152 = vmatprep.subr.bf16.mxu0 0
  %153 = vmatpush1.bf16.msra.mxu0 %v140
  %154 = vmatprep.subr.bf16.mxu0 0
  %155 = vmatpush1.bf16.msra.mxu0 %v139
  %156 = vmatprep.subr.bf16.mxu0 0
  %157 = vmatpush1.bf16.msra.mxu0 %v138
  %158 = vmatprep.subr.bf16.mxu0 0
  %159 = vmatpush1.bf16.msra.mxu0 %v137
  %160 = vmatprep.subr.bf16.mxu0 0
  %161 = vmatpush1.bf16.msra.mxu0 %v136
  %162 = vmatprep.subr.bf16.mxu0 0
  %163 = vmatpush1.bf16.msra.mxu0 %v135
  %164 = vmatprep.subr.bf16.mxu0 0
  %165 = vmatpush1.bf16.msra.mxu0 %v134
  %166 = vmatprep.subr.bf16.mxu0 0
  %167 = vmatpush2.bf16.msra.mxu0 0
  %168 = vmatprep.subr.bf16.mxu0 0
  %169 = vmatpush2.bf16.msra.mxu0 0
  %170 = vmatprep.subr.bf16.mxu0 0
  %171 = vmatpush2.bf16.msra.mxu0 0
  %172 = vmatprep.subr.bf16.mxu0 0
  %173 = vmatpush2.bf16.msra.mxu0 0
  %174 = vmatprep.subr.bf16.mxu0 0
  %175 = vmatpush2.bf16.msra.mxu0 0
  %176 = vmatprep.subr.bf16.mxu0 0
  %177 = vmatpush2.bf16.msra.mxu0 0
  %178 = vmatprep.subr.bf16.mxu0 0
  %179 = vmatpush2.bf16.msra.mxu0 0
  %180 = vmatprep.subr.bf16.mxu0 0
  %181 = vmatpush2.bf16.msra.mxu0 0
  %182 = vmatprep.mubr.bf16.mxu0 0
  %183 = vmatmul.mubr.bf16.gmra.mxu0 %v86
  %v184 = vpop.f32.mrf.mxu0
  %v185 = vadd.f32 0.0, %v184
  %v186 = vpop.f32.mrf.mxu0
  %v187 = vpop.f32.mrf.mxu0
  %v188 = vadd.f32 0.0, %v187
  %v189 = vpop.f32.mrf.mxu0
  %190 = vmatprep.mubr.bf16.mxu0 0
  %191 = vmatmul.mubr.bf16.gmra.mxu0 %v87
  %v192 = vpop.f32.mrf.mxu0
  %v193 = vadd.f32 0.0, %v192
  %v194 = vpop.f32.mrf.mxu0
  %v195 = vpop.f32.mrf.mxu0
  %v196 = vadd.f32 0.0, %v195
  %v197 = vpop.f32.mrf.mxu0
  %198 = vmatprep.mubr.bf16.mxu0 0
  %199 = vmatmul.mubr.bf16.gmra.mxu0 %v88
  %v200 = vpop.f32.mrf.mxu0
  %v201 = vadd.f32 0.0, %v200
  %v202 = vpop.f32.mrf.mxu0
  %v203 = vpop.f32.mrf.mxu0
  %v204 = vadd.f32 0.0, %v203
  %v205 = vpop.f32.mrf.mxu0
  %206 = vmatprep.mubr.bf16.mxu0 0
  %207 = vmatmul.mubr.bf16.gmra.mxu0 %v89
  %v208 = vpop.f32.mrf.mxu0
  %v209 = vadd.f32 0.0, %v208
  %v210 = vpop.f32.mrf.mxu0
  %v211 = vpop.f32.mrf.mxu0
  %v212 = vadd.f32 0.0, %v211
  %v213 = vpop.f32.mrf.mxu0
  %214 = vmatprep.mubr.bf16.mxu0 0
  %215 = vmatmul.mubr.bf16.gmra.mxu0 %v90
  %v216 = vpop.f32.mrf.mxu0
  %v217 = vadd.f32 0.0, %v216
  %v218 = vpop.f32.mrf.mxu0
  %v219 = vpop.f32.mrf.mxu0
  %v220 = vadd.f32 0.0, %v219
  %v221 = vpop.f32.mrf.mxu0
  %222 = vmatprep.mubr.bf16.mxu0 0
  %223 = vmatmul.mubr.bf16.gmra.mxu0 %v91
  %v224 = vpop.f32.mrf.mxu0
  %v225 = vadd.f32 0.0, %v224
  %v226 = vpop.f32.mrf.mxu0
  %v227 = vpop.f32.mrf.mxu0
  %v228 = vadd.f32 0.0, %v227
  %v229 = vpop.f32.mrf.mxu0
  %230 = vmatprep.mubr.bf16.mxu0 0
  %231 = vmatmul.mubr.bf16.gmra.mxu0 %v92
  %v232 = vpop.f32.mrf.mxu0
  %v233 = vadd.f32 0.0, %v232
  %v234 = vpop.f32.mrf.mxu0
  %v235 = vpop.f32.mrf.mxu0
  %v236 = vadd.f32 0.0, %v235
  %v237 = vpop.f32.mrf.mxu0
  %238 = vmatprep.mubr.bf16.mxu0 0
  %239 = vmatmul.mubr.bf16.gmra.mxu0 %v93
  %v240 = vpop.f32.mrf.mxu0
  %v241 = vadd.f32 0.0, %v240
  %v242 = vpop.f32.mrf.mxu0
  %v243 = vpop.f32.mrf.mxu0
  %v244 = vadd.f32 0.0, %v243
  %v245 = vpop.f32.mrf.mxu0
  %246 = vdwg.mxu0
  %v247 = vpack.c.bf16 %v188, %v185
  %v248 = vpack.c.bf16 %v196, %v193
  %v249 = vpack.c.bf16 %v204, %v201
  %v250 = vpack.c.bf16 %v212, %v209
  %v251 = vpack.c.bf16 %v220, %v217
  %v252 = vpack.c.bf16 %v228, %v225
  %v253 = vpack.c.bf16 %v236, %v233
  %v254 = vpack.c.bf16 %v244, %v241
  %v255 = vld [vmem:[%s2] sm:$0xf]
  %v256 = vld [vmem:[%s2 + $0x4] sm:$0xf]
  %v257 = vld [vmem:[%s2 + $0x8] sm:$0xf]
  %v258 = vld [vmem:[%s2 + $0xc] sm:$0xf]
  %v259 = vld [vmem:[%s2 + $0x10] sm:$0xf]
  %v260 = vld [vmem:[%s2 + $0x14] sm:$0xf]
  %v261 = vld [vmem:[%s2 + $0x18] sm:$0xf]
  %v262 = vld [vmem:[%s2 + $0x1c] sm:$0xf]
  %v263 = vld [vmem:[%s2 + $0x20] sm:$0xf]
  %v264 = vld [vmem:[%s2 + $0x24] sm:$0xf]
  %v265 = vld [vmem:[%s2 + $0x28] sm:$0xf]
  %v266 = vld [vmem:[%s2 + $0x2c] sm:$0xf]
  %v267 = vld [vmem:[%s2 + $0x30] sm:$0xf]
  %v268 = vld [vmem:[%s2 + $0x34] sm:$0xf]
  %v269 = vld [vmem:[%s2 + $0x38] sm:$0xf]
  %v270 = vld [vmem:[%s2 + $0x3c] sm:$0xf]
  %s271 = sshra.s32 %s21, 3
  %s272 = sand.u32 %s21, 7
  %s273 = smul.addr %s271, 4
  %s274 = scalar_lea.vmem %s1, %s273
  %v275 = vld [vmem:[%s274] sm:$0xf]
  %v276 = vld [vmem:[%s274 + $0x4] sm:$0xf]
  %v277 = vld [vmem:[%s274 + $0x8] sm:$0xf]
  %v278 = vld [vmem:[%s274 + $0xc] sm:$0xf]
  %v279 = vld [vmem:[%s274 + $0x10] sm:$0xf]
  %v280 = vld [vmem:[%s274 + $0x14] sm:$0xf]
  %v281 = vld [vmem:[%s274 + $0x18] sm:$0xf]
  %v282 = vld [vmem:[%s274 + $0x1c] sm:$0xf]
  %v283 = vld [vmem:[%s274 + $0x20] sm:$0xf]
  %v284 = vld [vmem:[%s274 + $0x24] sm:$0xf]
  %v285 = vld [vmem:[%s274 + $0x28] sm:$0xf]
  %v286 = vld [vmem:[%s274 + $0x2c] sm:$0xf]
  %v287 = vld [vmem:[%s274 + $0x30] sm:$0xf]
  %v288 = vld [vmem:[%s274 + $0x34] sm:$0xf]
  %v289 = vld [vmem:[%s274 + $0x38] sm:$0xf]
  %v290 = vld [vmem:[%s274 + $0x3c] sm:$0xf]
  %v291 = vld [vmem:[%s3] sm:$0xf]
  %v292 = vld [vmem:[%s3 + $0x4] sm:$0xf]
  %v293 = vld [vmem:[%s3 + $0x8] sm:$0xf]
  %v294 = vld [vmem:[%s3 + $0xc] sm:$0xf]
  %v295 = vld [vmem:[%s3 + $0x10] sm:$0xf]
  %v296 = vld [vmem:[%s3 + $0x14] sm:$0xf]
  %v297 = vld [vmem:[%s3 + $0x18] sm:$0xf]
  %v298 = vld [vmem:[%s3 + $0x1c] sm:$0xf]
  %v299 = vld [vmem:[%s3 + $0x20] sm:$0xf]
  %v300 = vld [vmem:[%s3 + $0x24] sm:$0xf]
  %v301 = vld [vmem:[%s3 + $0x28] sm:$0xf]
  %v302 = vld [vmem:[%s3 + $0x2c] sm:$0xf]
  %v303 = vld [vmem:[%s3 + $0x30] sm:$0xf]
  %v304 = vld [vmem:[%s3 + $0x34] sm:$0xf]
  %v305 = vld [vmem:[%s3 + $0x38] sm:$0xf]
  %v306 = vld [vmem:[%s3 + $0x3c] sm:$0xf]
  %v323 = vunpack.c.l.b16 %v275
  %v324 = vunpack.c.l.b16 %v276
  %v325 = vunpack.c.l.b16 %v277
  %v326 = vunpack.c.l.b16 %v278
  %v327 = vunpack.c.l.b16 %v279
  %v328 = vunpack.c.l.b16 %v280
  %v329 = vunpack.c.l.b16 %v281
  %v330 = vunpack.c.l.b16 %v282
  %v331 = vunpack.c.l.b16 %v283
  %v332 = vunpack.c.l.b16 %v284
  %v333 = vunpack.c.l.b16 %v285
  %v334 = vunpack.c.l.b16 %v286
  %v335 = vunpack.c.l.b16 %v287
  %v336 = vunpack.c.l.b16 %v288
  %v337 = vunpack.c.l.b16 %v289
  %v338 = vunpack.c.l.b16 %v290
  %v339 = vpack.c.b16 %v324, %v323
  %v340 = vpack.c.b16 %v326, %v325
  %v341 = vpack.c.b16 %v328, %v327
  %v342 = vpack.c.b16 %v330, %v329
  %v343 = vpack.c.b16 %v332, %v331
  %v344 = vpack.c.b16 %v334, %v333
  %v345 = vpack.c.b16 %v336, %v335
  %v346 = vpack.c.b16 %v338, %v337
  %v371 = vunpack.c.l.b16 %v291
  %v372 = vunpack.c.l.b16 %v292
  %v373 = vunpack.c.l.b16 %v293
  %v374 = vunpack.c.l.b16 %v294
  %v375 = vunpack.c.l.b16 %v295
  %v376 = vunpack.c.l.b16 %v296
  %v377 = vunpack.c.l.b16 %v297
  %v378 = vunpack.c.l.b16 %v298
  %v379 = vunpack.c.l.b16 %v299
  %v380 = vunpack.c.l.b16 %v300
  %v381 = vunpack.c.l.b16 %v301
  %v382 = vunpack.c.l.b16 %v302
  %v383 = vunpack.c.l.b16 %v303
  %v384 = vunpack.c.l.b16 %v304
  %v385 = vunpack.c.l.b16 %v305
  %v386 = vunpack.c.l.b16 %v306
  %v387 = vpack.c.b16 %v372, %v371
  %v388 = vpack.c.b16 %v374, %v373
  %v389 = vpack.c.b16 %v376, %v375
  %v390 = vpack.c.b16 %v378, %v377
  %v391 = vpack.c.b16 %v380, %v379
  %v392 = vpack.c.b16 %v382, %v381
  %v393 = vpack.c.b16 %v384, %v383
  %v394 = vpack.c.b16 %v386, %v385
  %403 = vmatprep.subr.bf16.mxu0 0
  %404 = vmatpush1.bf16.msra.mxu0 %v394
  %405 = vmatprep.subr.bf16.mxu0 0
  %406 = vmatpush1.bf16.msra.mxu0 %v393
  %407 = vmatprep.subr.bf16.mxu0 0
  %408 = vmatpush1.bf16.msra.mxu0 %v392
  %409 = vmatprep.subr.bf16.mxu0 0
  %410 = vmatpush1.bf16.msra.mxu0 %v391
  %411 = vmatprep.subr.bf16.mxu0 0
  %412 = vmatpush1.bf16.msra.mxu0 %v390
  %413 = vmatprep.subr.bf16.mxu0 0
  %414 = vmatpush1.bf16.msra.mxu0 %v389
  %415 = vmatprep.subr.bf16.mxu0 0
  %416 = vmatpush1.bf16.msra.mxu0 %v388
  %417 = vmatprep.subr.bf16.mxu0 0
  %418 = vmatpush1.bf16.msra.mxu0 %v387
  %419 = vmatprep.subr.bf16.mxu0 0
  %420 = vmatpush2.bf16.msra.mxu0 0
  %421 = vmatprep.subr.bf16.mxu0 0
  %422 = vmatpush2.bf16.msra.mxu0 0
  %423 = vmatprep.subr.bf16.mxu0 0
  %424 = vmatpush2.bf16.msra.mxu0 0
  %425 = vmatprep.subr.bf16.mxu0 0
  %426 = vmatpush2.bf16.msra.mxu0 0
  %427 = vmatprep.subr.bf16.mxu0 0
  %428 = vmatpush2.bf16.msra.mxu0 0
  %429 = vmatprep.subr.bf16.mxu0 0
  %430 = vmatpush2.bf16.msra.mxu0 0
  %431 = vmatprep.subr.bf16.mxu0 0
  %432 = vmatpush2.bf16.msra.mxu0 0
  %433 = vmatprep.subr.bf16.mxu0 0
  %434 = vmatpush2.bf16.msra.mxu0 0
  %435 = vmatprep.mubr.bf16.mxu0 0
  %436 = vmatmul.mubr.bf16.gmra.mxu0 %v339
  %v437 = vpop.f32.mrf.mxu0
  %v438 = vadd.f32 0.0, %v437
  %v439 = vpop.f32.mrf.mxu0
  %v440 = vpop.f32.mrf.mxu0
  %v441 = vadd.f32 0.0, %v440
  %v442 = vpop.f32.mrf.mxu0
  %443 = vmatprep.mubr.bf16.mxu0 0
  %444 = vmatmul.mubr.bf16.gmra.mxu0 %v340
  %v445 = vpop.f32.mrf.mxu0
  %v446 = vadd.f32 0.0, %v445
  %v447 = vpop.f32.mrf.mxu0
  %v448 = vpop.f32.mrf.mxu0
  %v449 = vadd.f32 0.0, %v448
  %v450 = vpop.f32.mrf.mxu0
  %451 = vmatprep.mubr.bf16.mxu0 0
  %452 = vmatmul.mubr.bf16.gmra.mxu0 %v341
  %v453 = vpop.f32.mrf.mxu0
  %v454 = vadd.f32 0.0, %v453
  %v455 = vpop.f32.mrf.mxu0
  %v456 = vpop.f32.mrf.mxu0
  %v457 = vadd.f32 0.0, %v456
  %v458 = vpop.f32.mrf.mxu0
  %459 = vmatprep.mubr.bf16.mxu0 0
  %460 = vmatmul.mubr.bf16.gmra.mxu0 %v342
  %v461 = vpop.f32.mrf.mxu0
  %v462 = vadd.f32 0.0, %v461
  %v463 = vpop.f32.mrf.mxu0
  %v464 = vpop.f32.mrf.mxu0
  %v465 = vadd.f32 0.0, %v464
  %v466 = vpop.f32.mrf.mxu0
  %467 = vmatprep.mubr.bf16.mxu0 0
  %468 = vmatmul.mubr.bf16.gmra.mxu0 %v343
  %v469 = vpop.f32.mrf.mxu0
  %v470 = vadd.f32 0.0, %v469
  %v471 = vpop.f32.mrf.mxu0
  %v472 = vpop.f32.mrf.mxu0
  %v473 = vadd.f32 0.0, %v472
  %v474 = vpop.f32.mrf.mxu0
  %475 = vmatprep.mubr.bf16.mxu0 0
  %476 = vmatmul.mubr.bf16.gmra.mxu0 %v344
  %v477 = vpop.f32.mrf.mxu0
  %v478 = vadd.f32 0.0, %v477
  %v479 = vpop.f32.mrf.mxu0
  %v480 = vpop.f32.mrf.mxu0
  %v481 = vadd.f32 0.0, %v480
  %v482 = vpop.f32.mrf.mxu0
  %483 = vmatprep.mubr.bf16.mxu0 0
  %484 = vmatmul.mubr.bf16.gmra.mxu0 %v345
  %v485 = vpop.f32.mrf.mxu0
  %v486 = vadd.f32 0.0, %v485
  %v487 = vpop.f32.mrf.mxu0
  %v488 = vpop.f32.mrf.mxu0
  %v489 = vadd.f32 0.0, %v488
  %v490 = vpop.f32.mrf.mxu0
  %491 = vmatprep.mubr.bf16.mxu0 0
  %492 = vmatmul.mubr.bf16.gmra.mxu0 %v346
  %v493 = vpop.f32.mrf.mxu0
  %v494 = vadd.f32 0.0, %v493
  %v495 = vpop.f32.mrf.mxu0
  %v496 = vpop.f32.mrf.mxu0
  %v497 = vadd.f32 0.0, %v496
  %v498 = vpop.f32.mrf.mxu0
  %499 = vdwg.mxu0
  %v516 = vunpack.c.l.b16 %v255
  %v517 = vunpack.c.l.b16 %v256
  %v518 = vunpack.c.l.b16 %v257
  %v519 = vunpack.c.l.b16 %v258
  %v520 = vunpack.c.l.b16 %v259
  %v521 = vunpack.c.l.b16 %v260
  %v522 = vunpack.c.l.b16 %v261
  %v523 = vunpack.c.l.b16 %v262
  %v524 = vunpack.c.l.b16 %v263
  %v525 = vunpack.c.l.b16 %v264
  %v526 = vunpack.c.l.b16 %v265
  %v527 = vunpack.c.l.b16 %v266
  %v528 = vunpack.c.l.b16 %v267
  %v529 = vunpack.c.l.b16 %v268
  %v530 = vunpack.c.l.b16 %v269
  %v531 = vunpack.c.l.b16 %v270
  %v532 = vpack.c.b16 %v517, %v516
  %v533 = vpack.c.b16 %v519, %v518
  %v534 = vpack.c.b16 %v521, %v520
  %v535 = vpack.c.b16 %v523, %v522
  %v536 = vpack.c.b16 %v525, %v524
  %v537 = vpack.c.b16 %v527, %v526
  %v538 = vpack.c.b16 %v529, %v528
  %v539 = vpack.c.b16 %v531, %v530
  %548 = vmatprep.subr.bf16.mxu0 0
  %549 = vmatpush1.bf16.msra.mxu0 %v539
  %550 = vmatprep.subr.bf16.mxu0 0
  %551 = vmatpush1.bf16.msra.mxu0 %v538
  %552 = vmatprep.subr.bf16.mxu0 0
  %553 = vmatpush1.bf16.msra.mxu0 %v537
  %554 = vmatprep.subr.bf16.mxu0 0
  %555 = vmatpush1.bf16.msra.mxu0 %v536
  %556 = vmatprep.subr.bf16.mxu0 0
  %557 = vmatpush1.bf16.msra.mxu0 %v535
  %558 = vmatprep.subr.bf16.mxu0 0
  %559 = vmatpush1.bf16.msra.mxu0 %v534
  %560 = vmatprep.subr.bf16.mxu0 0
  %561 = vmatpush1.bf16.msra.mxu0 %v533
  %562 = vmatprep.subr.bf16.mxu0 0
  %563 = vmatpush1.bf16.msra.mxu0 %v532
  %564 = vmatprep.subr.bf16.mxu0 0
  %565 = vmatpush2.bf16.msra.mxu0 0
  %566 = vmatprep.subr.bf16.mxu0 0
  %567 = vmatpush2.bf16.msra.mxu0 0
  %568 = vmatprep.subr.bf16.mxu0 0
  %569 = vmatpush2.bf16.msra.mxu0 0
  %570 = vmatprep.subr.bf16.mxu0 0
  %571 = vmatpush2.bf16.msra.mxu0 0
  %572 = vmatprep.subr.bf16.mxu0 0
  %573 = vmatpush2.bf16.msra.mxu0 0
  %574 = vmatprep.subr.bf16.mxu0 0
  %575 = vmatpush2.bf16.msra.mxu0 0
  %576 = vmatprep.subr.bf16.mxu0 0
  %577 = vmatpush2.bf16.msra.mxu0 0
  %578 = vmatprep.subr.bf16.mxu0 0
  %579 = vmatpush2.bf16.msra.mxu0 0
  %580 = vmatprep.mubr.bf16.mxu0 0
  %581 = vmatmul.mubr.bf16.gmra.mxu0 %v247
  %v582 = vpop.f32.mrf.mxu0
  %v583 = vadd.f32 %v438, %v582
  %v584 = vpop.f32.mrf.mxu0
  %v585 = vpop.f32.mrf.mxu0
  %v586 = vadd.f32 %v441, %v585
  %v587 = vpop.f32.mrf.mxu0
  %588 = vmatprep.mubr.bf16.mxu0 0
  %589 = vmatmul.mubr.bf16.gmra.mxu0 %v248
  %v590 = vpop.f32.mrf.mxu0
  %v591 = vadd.f32 %v446, %v590
  %v592 = vpop.f32.mrf.mxu0
  %v593 = vpop.f32.mrf.mxu0
  %v594 = vadd.f32 %v449, %v593
  %v595 = vpop.f32.mrf.mxu0
  %596 = vmatprep.mubr.bf16.mxu0 0
  %597 = vmatmul.mubr.bf16.gmra.mxu0 %v249
  %v598 = vpop.f32.mrf.mxu0
  %v599 = vadd.f32 %v454, %v598
  %v600 = vpop.f32.mrf.mxu0
  %v601 = vpop.f32.mrf.mxu0
  %v602 = vadd.f32 %v457, %v601
  %v603 = vpop.f32.mrf.mxu0
  %604 = vmatprep.mubr.bf16.mxu0 0
  %605 = vmatmul.mubr.bf16.gmra.mxu0 %v250
  %v606 = vpop.f32.mrf.mxu0
  %v607 = vadd.f32 %v462, %v606
  %v608 = vpop.f32.mrf.mxu0
  %v609 = vpop.f32.mrf.mxu0
  %v610 = vadd.f32 %v465, %v609
  %v611 = vpop.f32.mrf.mxu0
  %612 = vmatprep.mubr.bf16.mxu0 0
  %613 = vmatmul.mubr.bf16.gmra.mxu0 %v251
  %v614 = vpop.f32.mrf.mxu0
  %v615 = vadd.f32 %v470, %v614
  %v616 = vpop.f32.mrf.mxu0
  %v617 = vpop.f32.mrf.mxu0
  %v618 = vadd.f32 %v473, %v617
  %v619 = vpop.f32.mrf.mxu0
  %620 = vmatprep.mubr.bf16.mxu0 0
  %621 = vmatmul.mubr.bf16.gmra.mxu0 %v252
  %v622 = vpop.f32.mrf.mxu0
  %v623 = vadd.f32 %v478, %v622
  %v624 = vpop.f32.mrf.mxu0
  %v625 = vpop.f32.mrf.mxu0
  %v626 = vadd.f32 %v481, %v625
  %v627 = vpop.f32.mrf.mxu0
  %628 = vmatprep.mubr.bf16.mxu0 0
  %629 = vmatmul.mubr.bf16.gmra.mxu0 %v253
  %v630 = vpop.f32.mrf.mxu0
  %v631 = vadd.f32 %v486, %v630
  %v632 = vpop.f32.mrf.mxu0
  %v633 = vpop.f32.mrf.mxu0
  %v634 = vadd.f32 %v489, %v633
  %v635 = vpop.f32.mrf.mxu0
  %636 = vmatprep.mubr.bf16.mxu0 0
  %637 = vmatmul.mubr.bf16.gmra.mxu0 %v254
  %v638 = vpop.f32.mrf.mxu0
  %v639 = vadd.f32 %v494, %v638
  %v640 = vpop.f32.mrf.mxu0
  %v641 = vpop.f32.mrf.mxu0
  %v642 = vadd.f32 %v497, %v641
  %v643 = vpop.f32.mrf.mxu0
  %644 = vdwg.mxu0
  %v645 = vld [vmem:[%s4] sm:$0x1]
  %v647 = vlaneseq
  %v648 = vshrl.u32 %v647, 7
  %v649 = vsub.s32 0, %v648
  %v650 = vrot.slane %v645, %v649
  %v652 = vadd.f32 %v583, %v650
  %v653 = vadd.f32 %v586, %v650
  %v654 = vadd.f32 %v591, %v650
  %v655 = vadd.f32 %v594, %v650
  %v656 = vadd.f32 %v599, %v650
  %v657 = vadd.f32 %v602, %v650
  %v658 = vadd.f32 %v607, %v650
  %v659 = vadd.f32 %v610, %v650
  %v660 = vadd.f32 %v615, %v650
  %v661 = vadd.f32 %v618, %v650
  %v662 = vadd.f32 %v623, %v650
  %v663 = vadd.f32 %v626, %v650
  %v664 = vadd.f32 %v631, %v650
  %v665 = vadd.f32 %v634, %v650
  %v666 = vadd.f32 %v639, %v650
  %v667 = vadd.f32 %v642, %v650
  %v668 = vmax.f32 %v652, 0.0
  %v669 = vmax.f32 %v653, 0.0
  %v670 = vmax.f32 %v654, 0.0
  %v671 = vmax.f32 %v655, 0.0
  %v672 = vmax.f32 %v656, 0.0
  %v673 = vmax.f32 %v657, 0.0
  %v674 = vmax.f32 %v658, 0.0
  %v675 = vmax.f32 %v659, 0.0
  %v676 = vmax.f32 %v660, 0.0
  %v677 = vmax.f32 %v661, 0.0
  %v678 = vmax.f32 %v662, 0.0
  %v679 = vmax.f32 %v663, 0.0
  %v680 = vmax.f32 %v664, 0.0
  %v681 = vmax.f32 %v665, 0.0
  %v682 = vmax.f32 %v666, 0.0
  %v683 = vmax.f32 %v667, 0.0
  %v684 = vpack.c.bf16 %v669, %v668
  %v685 = vpack.c.bf16 %v671, %v670
  %v686 = vpack.c.bf16 %v673, %v672
  %v687 = vpack.c.bf16 %v675, %v674
  %v688 = vpack.c.bf16 %v677, %v676
  %v689 = vpack.c.bf16 %v679, %v678
  %v690 = vpack.c.bf16 %v681, %v680
  %v691 = vpack.c.bf16 %v683, %v682
  %v700 = vunpack.c.l.b16 %v684
  %v701 = vunpack.c.h.b16 %v684
  %v702 = vunpack.c.l.b16 %v685
  %v703 = vunpack.c.h.b16 %v685
  %v704 = vunpack.c.l.b16 %v686
  %v705 = vunpack.c.h.b16 %v686
  %v706 = vunpack.c.l.b16 %v687
  %v707 = vunpack.c.h.b16 %v687
  %v708 = vunpack.c.l.b16 %v688
  %v709 = vunpack.c.h.b16 %v688
  %v710 = vunpack.c.l.b16 %v689
  %v711 = vunpack.c.h.b16 %v689
  %v712 = vunpack.c.l.b16 %v690
  %v713 = vunpack.c.h.b16 %v690
  %v714 = vunpack.c.l.b16 %v691
  %v715 = vunpack.c.h.b16 %v691
  %v716 = vpack.c.b16 %v700, %v700
  %v717 = vpack.c.b16 %v701, %v701
  %v718 = vpack.c.b16 %v702, %v702
  %v719 = vpack.c.b16 %v703, %v703
  %v720 = vpack.c.b16 %v704, %v704
  %v721 = vpack.c.b16 %v705, %v705
  %v722 = vpack.c.b16 %v706, %v706
  %v723 = vpack.c.b16 %v707, %v707
  %v724 = vpack.c.b16 %v708, %v708
  %v725 = vpack.c.b16 %v709, %v709
  %v726 = vpack.c.b16 %v710, %v710
  %v727 = vpack.c.b16 %v711, %v711
  %v728 = vpack.c.b16 %v712, %v712
  %v729 = vpack.c.b16 %v713, %v713
  %v730 = vpack.c.b16 %v714, %v714
  %v731 = vpack.c.b16 %v715, %v715
  %748 = vst [vmem:[%s5] sm:$0xf] %v716
  %749 = vst [vmem:[%s5 + $0x4] sm:$0xf] %v717
  %750 = vst [vmem:[%s5 + $0x8] sm:$0xf] %v718
  %751 = vst [vmem:[%s5 + $0xc] sm:$0xf] %v719
  %752 = vst [vmem:[%s5 + $0x10] sm:$0xf] %v720
  %753 = vst [vmem:[%s5 + $0x14] sm:$0xf] %v721
  %754 = vst [vmem:[%s5 + $0x18] sm:$0xf] %v722
  %755 = vst [vmem:[%s5 + $0x1c] sm:$0xf] %v723
  %756 = vst [vmem:[%s5 + $0x20] sm:$0xf] %v724
  %757 = vst [vmem:[%s5 + $0x24] sm:$0xf] %v725
  %758 = vst [vmem:[%s5 + $0x28] sm:$0xf] %v726
  %759 = vst [vmem:[%s5 + $0x2c] sm:$0xf] %v727
  %760 = vst [vmem:[%s5 + $0x30] sm:$0xf] %v728
  %761 = vst [vmem:[%s5 + $0x34] sm:$0xf] %v729
  %762 = vst [vmem:[%s5 + $0x38] sm:$0xf] %v730
  %763 = vst [vmem:[%s5 + $0x3c] sm:$0xf] %v731
  // Predicated region
  $region22: #{gnn_forward.2} parent=0 // pred_check
    _
  $region23: #{gnn_forward.2} parent=0 // pred_check_branch
    %765 = sbr.rel (0) target = $region25
  $region24: #{gnn_forward.2} parent=0 // pred_region
    _
  $region25: #{gnn_forward.2} parent=0 // pred_fallthru
    _
  // Predicated region
  $region26: #{gnn_forward.2} parent=0 // pred_check
    _
  $region27: #{gnn_forward.2} parent=0 // pred_check_branch
    %767 = sbr.rel (0) target = $region29
  $region28: #{gnn_forward.2} parent=0 // pred_region
    _
  $region29: #{gnn_forward.2} parent=0 // pred_fallthru
    _

</llo_original>
